<compile_context>
chip_gen: v7x
topology: tpu7x:2x2x1
jax: 0.10.0
libtpu: 0.0.40
codegen_flags: <defaults>
</compile_context>

<pallas_src>
import functools

import jax
import jax.numpy as jnp
from jax.experimental import pallas as pl
from jax.experimental.pallas import tpu as pltpu

# Module hyper-parameters (harr=True, imp_map=True, in_1=6, in_2=3, clamp=2.0)
CLAMP = 2.0
SPLIT1 = 6 * 4 + 12        # split_len1 + imp = 36
SPLIT2 = 3 * 4             # split_len2      = 12
C_TOTAL = SPLIT1 + SPLIT2  # 48
PAD1 = 40                  # SPLIT1 rounded up to a sublane multiple (8)
PAD2 = 16                  # SPLIT2 rounded up to a sublane multiple (8)


def _round_up(x, m):
    return (x + m - 1) // m * m


def _e(s):
    # e(s) = exp(clamp * 2 * (sigmoid(s) - 0.5)) == exp(clamp * tanh(s / 2))
    return jnp.exp(CLAMP * jnp.tanh(0.5 * s))


def inv_block_kernel(x_ref, wa_ref, ba_ref, wb_ref, bb_ref, out_ref):
    """Fused affine-coupling forward (rev=False) for one (48, TM) pixel tile.

    Layout: channels on sublanes (48 rows), pixels on lanes (TM columns).
    All slices below start/stop at multiples of 8 -> no sublane masking.
    """
    x = x_ref[...].astype(jnp.float32)                      # (48, TM) dense

    # Stage A: fused f|p subnets on the dense x tile.
    #   a rows [0:36]=t2, [36:40]=0, [40:76]=s2, [76:80]=0
    a = jnp.dot(wa_ref[...], x, preferred_element_type=jnp.float32) + ba_ref[...]
    t2 = a[:PAD1, :]                                        # (40, TM)
    s2 = a[PAD1:, :]                                        # (40, TM)
    # y1 rows [0:36] = e(s2)*x1 + t2 ; rows [36:40] = x rows 36..39 (ignored
    # later: stage-B weights have zero columns there).
    y1 = _e(s2) * x[:PAD1, :] + t2                          # (40, TM)

    # Stage B: fused r|y subnets on the dense 40-row y1 block.
    #   b rows [0:4]=0, [4:16]=s1, [16:20]=0, [20:32]=t1
    b = jnp.dot(wb_ref[...], y1, preferred_element_type=jnp.float32) + bb_ref[...]
    s1 = b[:PAD2, :]                                        # (16, TM)
    t1 = b[PAD2:, :]                                        # (16, TM)
    # x rows 32..47 (aligned): rows 4..15 of this block are x2.
    # y2 rows [4:16] = e(s1)*x2 + t1 ; rows [0:4] garbage (discarded below).
    y2 = _e(s1) * x[C_TOTAL - PAD2:, :] + t1                # (16, TM)

    # Assemble output (all stores sublane-aligned, full lane width):
    #   out rows  0..31 <- y1[0:32]
    #   out rows 32..35 <- y1[32:36],  rows 36..39 <- y2[4:8]
    #   out rows 40..47 <- y2[8:16]
    out_ref[0:C_TOTAL - PAD2, :] = y1[0:C_TOTAL - PAD2, :].astype(out_ref.dtype)
    row8 = jax.lax.broadcasted_iota(jnp.int32, (8, y2.shape[-1]), 0)
    mid = jnp.where(row8 < (PAD2 - SPLIT2), y1[C_TOTAL - PAD2:PAD1, :], y2[:8, :])
    out_ref[C_TOTAL - PAD2:PAD1, :] = mid.astype(out_ref.dtype)
    out_ref[PAD1:, :] = y2[8:, :].astype(out_ref.dtype)


def _pack_weights(params):
    """Zero-pad the four tiny subnet weights into two aligned matrices."""
    f32 = jnp.float32
    # Stage A: (80, 48) acting on the dense x tile (only x2 columns non-zero).
    wa = jnp.zeros((2 * PAD1, C_TOTAL), f32)
    wa = wa.at[0:SPLIT1, SPLIT1:].set(params["wf"].T.astype(f32))          # t2
    wa = wa.at[PAD1:PAD1 + SPLIT1, SPLIT1:].set(params["wp"].T.astype(f32))  # s2
    ba = jnp.zeros((2 * PAD1, 1), f32)
    ba = ba.at[0:SPLIT1, 0].set(params["bf"].reshape(-1).astype(f32))
    ba = ba.at[PAD1:PAD1 + SPLIT1, 0].set(params["bp"].reshape(-1).astype(f32))

    # Stage B: (32, 40) acting on the dense y1 block (junk columns 36..39 zero).
    wb = jnp.zeros((2 * PAD2, PAD1), f32)
    wb = wb.at[PAD2 - SPLIT2:PAD2, 0:SPLIT1].set(params["wr"].T.astype(f32))      # s1
    wb = wb.at[2 * PAD2 - SPLIT2:, 0:SPLIT1].set(params["wy"].T.astype(f32))      # t1
    bb = jnp.zeros((2 * PAD2, 1), f32)
    bb = bb.at[PAD2 - SPLIT2:PAD2, 0].set(params["br"].reshape(-1).astype(f32))
    bb = bb.at[2 * PAD2 - SPLIT2:, 0].set(params["by"].reshape(-1).astype(f32))
    return wa, ba, wb, bb


@functools.partial(jax.jit, static_argnames=("tm_pix",))
def inv_block_affine(x_nchw, params, tm_pix=8192):
    """x_nchw: (N, 48, H, W) float -> (N, 48, H, W) float (rev=False forward)."""
    assert tm_pix % 128 == 0
    N, C, H, W = x_nchw.shape
    assert C == C_TOTAL
    M = H * W

    # Free reshape: channels stay on the sublane axis, pixels on the lane axis.
    x3 = x_nchw.reshape(N, C, M)

    # Lane-dense pixel tiling: pad pixel extent to a multiple of 128, pick a
    # big tile, then pad up to a whole number of tiles.
    m128 = _round_up(M, 128)
    tm = min(tm_pix, m128)
    Mp = _round_up(m128, tm)
    if Mp != M:
        x3 = jnp.pad(x3, ((0, 0), (0, 0), (0, Mp - M)))

    wa, ba, wb, bb = _pack_weights(params)

    tile_spec = pl.BlockSpec((None, C_TOTAL, tm), lambda n, p: (n, 0, p))
    full_spec = lambda shape: pl.BlockSpec(shape, lambda n, p: (0, 0))

    out = pl.pallas_call(
        inv_block_kernel,
        out_shape=jax.ShapeDtypeStruct((N, C_TOTAL, Mp), x_nchw.dtype),
        grid_spec=pltpu.PrefetchScalarGridSpec(
            num_scalar_prefetch=0,
            grid=(N, Mp // tm),
            in_specs=[
                tile_spec,                          # x tile (48, tm)
                full_spec((2 * PAD1, C_TOTAL)),     # wa (80, 48)
                full_spec((2 * PAD1, 1)),           # ba (80, 1)
                full_spec((2 * PAD2, PAD1)),        # wb (32, 40)
                full_spec((2 * PAD2, 1)),           # bb (32, 1)
            ],
            out_specs=tile_spec,                    # y tile (48, tm)
        ),
        compiler_params=pltpu.CompilerParams(
            dimension_semantics=("parallel", "parallel")),
    )(x3, wa, ba, wb, bb)

    if Mp != M:
        out = out[:, :, :M]
    return out.reshape(N, C_TOTAL, H, W)


def make_params(key):
    """Deterministic synthetic parameters for the four 1x1-conv subnets."""
    ks = jax.random.split(key, 8)
    s = 0.1
    return {
        # f, p : split_len2 -> split_len1+imp
        "wf": s * jax.random.normal(ks[0], (SPLIT2, SPLIT1), jnp.float32),
        "bf": s * jax.random.normal(ks[1], (1, SPLIT1), jnp.float32),
        "wp": s * jax.random.normal(ks[2], (SPLIT2, SPLIT1), jnp.float32),
        "bp": s * jax.random.normal(ks[3], (1, SPLIT1), jnp.float32),
        # r, y : split_len1+imp -> split_len2
        "wr": s * jax.random.normal(ks[4], (SPLIT1, SPLIT2), jnp.float32),
        "br": s * jax.random.normal(ks[5], (1, SPLIT2), jnp.float32),
        "wy": s * jax.random.normal(ks[6], (SPLIT1, SPLIT2), jnp.float32),
        "by": s * jax.random.normal(ks[7], (1, SPLIT2), jnp.float32),
    }


def reference_forward(x_nchw, params):
    """Pure-JAX reference mirroring the PyTorch forward (rev=False, sigmoid form)."""
    N, _, H, W = x_nchw.shape
    x = jnp.transpose(x_nchw, (0, 2, 3, 1)).reshape(-1, C_TOTAL)
    x1, x2 = x[:, :SPLIT1], x[:, SPLIT1:]
    e = lambda s: jnp.exp(CLAMP * 2.0 * (jax.nn.sigmoid(s) - 0.5))
    t2 = x2 @ params["wf"] + params["bf"]
    s2 = x2 @ params["wp"] + params["bp"]
    y1 = e(s2) * x1 + t2
    s1 = y1 @ params["wr"] + params["br"]
    t1 = y1 @ params["wy"] + params["by"]
    y2 = e(s1) * x2 + t1
    out = jnp.concatenate([y1, y2], axis=-1)
    return jnp.transpose(out.reshape(N, H, W, C_TOTAL), (0, 3, 1, 2))


if __name__ == "__main__":
    key = jax.random.PRNGKey(0)
    k_x, k_p = jax.random.split(key)

    N, H, W = 2, 16, 16
    x = jax.random.normal(k_x, (N, C_TOTAL, H, W), jnp.float32)  # NCHW, C=48
    params = make_params(k_p)

    y = inv_block_affine(x, params)
    y = jax.block_until_ready(y)

    y_ref = reference_forward(x, params)
    assert y.shape == (N, C_TOTAL, H, W)
    assert jnp.allclose(y, y_ref, atol=1e-4, rtol=1e-4), "mismatch vs reference"

    print("KERNEL_OK")
</pallas_src>

<mosaic_0001>
module attributes {stable_mosaic.version = 11 : i64} {
  func.func @inv_block_kernel(%arg0: i32, %arg1: i32, %arg2: memref<1x48x256xf32, #tpu.memory_space<vmem>>, %arg3: memref<80x48xf32, #tpu.memory_space<vmem>>, %arg4: memref<80x1xf32, #tpu.memory_space<vmem>>, %arg5: memref<32x40xf32, #tpu.memory_space<vmem>>, %arg6: memref<32x1xf32, #tpu.memory_space<vmem>>, %arg7: memref<1x48x256xf32, #tpu.memory_space<vmem>>) attributes {dimension_semantics = [#tpu.dimension_semantics<parallel>, #tpu.dimension_semantics<parallel>], iteration_bounds = array<i64: 2, 1>, scalar_prefetch = 0 : i64, scratch_operands = 0 : i64, tpu.core_type = #tpu.core_type<tc>, window_params = [{transform_indices = @transform_0, window_bounds = array<i64: 1, 48, 256>}, {pipeline_mode = #tpu.pipeline_mode<synchronous>, transform_indices = @transform_1, window_bounds = array<i64: 80, 48>}, {pipeline_mode = #tpu.pipeline_mode<synchronous>, transform_indices = @transform_2, window_bounds = array<i64: 80, 1>}, {pipeline_mode = #tpu.pipeline_mode<synchronous>, transform_indices = @transform_3, window_bounds = array<i64: 32, 40>}, {pipeline_mode = #tpu.pipeline_mode<synchronous>, transform_indices = @transform_4, window_bounds = array<i64: 32, 1>}, {transform_indices = @transform_5, window_bounds = array<i64: 1, 48, 256>}]} {
    %c0 = arith.constant 0 : index
    %c0_0 = arith.constant 0 : index
    %c0_1 = arith.constant 0 : index
    %0 = vector.load %arg2[%c0, %c0_0, %c0_1] : memref<1x48x256xf32, #tpu.memory_space<vmem>>, vector<1x48x256xf32>
    %1 = vector.shape_cast %0 : vector<1x48x256xf32> to vector<48x256xf32>
    %c0_2 = arith.constant 0 : index
    %c0_3 = arith.constant 0 : index
    %2 = vector.load %arg3[%c0_2, %c0_3] : memref<80x48xf32, #tpu.memory_space<vmem>>, vector<80x48xf32>
    %cst = arith.constant dense<0.000000e+00> : vector<80x256xf32>
    %3 = tpu.matmul %2, %1, %cst {dimension_numbers = #tpu.dot_dimension_numbers<[1], [0], [0], [1], [0, 0, 1, 1], [], []>} : vector<80x48xf32>, vector<48x256xf32>, vector<80x256xf32> -> vector<80x256xf32>
    %c0_4 = arith.constant 0 : index
    %c0_5 = arith.constant 0 : index
    %4 = vector.load %arg4[%c0_4, %c0_5] : memref<80x1xf32, #tpu.memory_space<vmem>>, vector<80x1xf32>
    %5 = vector.broadcast %4 : vector<80x1xf32> to vector<80x256xf32>
    %6 = arith.addf %3, %5 : vector<80x256xf32>
    %7 = vector.extract_strided_slice %6 {offsets = [0, 0], sizes = [40, 256], strides = [1, 1]} : vector<80x256xf32> to vector<40x256xf32>
    %8 = vector.extract_strided_slice %6 {offsets = [40, 0], sizes = [40, 256], strides = [1, 1]} : vector<80x256xf32> to vector<40x256xf32>
    %cst_6 = arith.constant 5.000000e-01 : f32
    %9 = vector.broadcast %cst_6 : f32 to vector<40x256xf32>
    %10 = arith.mulf %9, %8 : vector<40x256xf32>
    %11 = math.tanh %10 : vector<40x256xf32>
    %cst_7 = arith.constant 2.000000e+00 : f32
    %12 = vector.broadcast %cst_7 : f32 to vector<40x256xf32>
    %13 = arith.mulf %12, %11 : vector<40x256xf32>
    %14 = math.exp %13 : vector<40x256xf32>
    %15 = vector.extract_strided_slice %1 {offsets = [0, 0], sizes = [40, 256], strides = [1, 1]} : vector<48x256xf32> to vector<40x256xf32>
    %16 = arith.mulf %14, %15 : vector<40x256xf32>
    %17 = arith.addf %16, %7 : vector<40x256xf32>
    %c0_8 = arith.constant 0 : index
    %c0_9 = arith.constant 0 : index
    %18 = vector.load %arg5[%c0_8, %c0_9] : memref<32x40xf32, #tpu.memory_space<vmem>>, vector<32x40xf32>
    %cst_10 = arith.constant dense<0.000000e+00> : vector<32x256xf32>
    %19 = tpu.matmul %18, %17, %cst_10 {dimension_numbers = #tpu.dot_dimension_numbers<[1], [0], [0], [1], [0, 0, 1, 1], [], []>} : vector<32x40xf32>, vector<40x256xf32>, vector<32x256xf32> -> vector<32x256xf32>
    %c0_11 = arith.constant 0 : index
    %c0_12 = arith.constant 0 : index
    %20 = vector.load %arg6[%c0_11, %c0_12] : memref<32x1xf32, #tpu.memory_space<vmem>>, vector<32x1xf32>
    %21 = vector.broadcast %20 : vector<32x1xf32> to vector<32x256xf32>
    %22 = arith.addf %19, %21 : vector<32x256xf32>
    %23 = vector.extract_strided_slice %22 {offsets = [0, 0], sizes = [16, 256], strides = [1, 1]} : vector<32x256xf32> to vector<16x256xf32>
    %24 = vector.extract_strided_slice %22 {offsets = [16, 0], sizes = [16, 256], strides = [1, 1]} : vector<32x256xf32> to vector<16x256xf32>
    %cst_13 = arith.constant 5.000000e-01 : f32
    %25 = vector.broadcast %cst_13 : f32 to vector<16x256xf32>
    %26 = arith.mulf %25, %23 : vector<16x256xf32>
    %27 = math.tanh %26 : vector<16x256xf32>
    %cst_14 = arith.constant 2.000000e+00 : f32
    %28 = vector.broadcast %cst_14 : f32 to vector<16x256xf32>
    %29 = arith.mulf %28, %27 : vector<16x256xf32>
    %30 = math.exp %29 : vector<16x256xf32>
    %31 = vector.extract_strided_slice %1 {offsets = [32, 0], sizes = [16, 256], strides = [1, 1]} : vector<48x256xf32> to vector<16x256xf32>
    %32 = arith.mulf %30, %31 : vector<16x256xf32>
    %33 = arith.addf %32, %24 : vector<16x256xf32>
    %34 = vector.extract_strided_slice %17 {offsets = [0, 0], sizes = [32, 256], strides = [1, 1]} : vector<40x256xf32> to vector<32x256xf32>
    %c0_15 = arith.constant 0 : index
    %c0_16 = arith.constant 0 : index
    %c0_17 = arith.constant 0 : index
    %35 = vector.load %arg7[%c0_15, %c0_16, %c0_17] : memref<1x48x256xf32, #tpu.memory_space<vmem>>, vector<1x32x256xf32>
    %36 = vector.shape_cast %35 : vector<1x32x256xf32> to vector<32x256xf32>
    %37 = vector.shape_cast %34 : vector<32x256xf32> to vector<1x32x256xf32>
    tpu.vector_store %arg7[%c0_15, %c0_16, %c0_17], %37 {strides = array<i32>} : memref<1x48x256xf32, #tpu.memory_space<vmem>>, vector<1x32x256xf32>,
    %38 = tpu.iota {dimensions = array<i32: 0>} : vector<8x256xi32>
    %c4_i32 = arith.constant 4 : i32
    %39 = vector.broadcast %c4_i32 : i32 to vector<8x256xi32>
    %40 = arith.cmpi slt, %38, %39 : vector<8x256xi32>
    %41 = vector.extract_strided_slice %17 {offsets = [32, 0], sizes = [8, 256], strides = [1, 1]} : vector<40x256xf32> to vector<8x256xf32>
    %42 = vector.extract_strided_slice %33 {offsets = [0, 0], sizes = [8, 256], strides = [1, 1]} : vector<16x256xf32> to vector<8x256xf32>
    %43 = arith.select %40, %41, %42 : vector<8x256xi1>, vector<8x256xf32>
    %c0_18 = arith.constant 0 : index
    %c32 = arith.constant 32 : index
    %c0_19 = arith.constant 0 : index
    %44 = vector.load %arg7[%c0_18, %c32, %c0_19] : memref<1x48x256xf32, #tpu.memory_space<vmem>>, vector<1x8x256xf32>
    %45 = vector.shape_cast %44 : vector<1x8x256xf32> to vector<8x256xf32>
    %46 = vector.shape_cast %43 : vector<8x256xf32> to vector<1x8x256xf32>
    tpu.vector_store %arg7[%c0_18, %c32, %c0_19], %46 {strides = array<i32>} : memref<1x48x256xf32, #tpu.memory_space<vmem>>, vector<1x8x256xf32>,
    %47 = vector.extract_strided_slice %33 {offsets = [8, 0], sizes = [8, 256], strides = [1, 1]} : vector<16x256xf32> to vector<8x256xf32>
    %c0_20 = arith.constant 0 : index
    %c40 = arith.constant 40 : index
    %c0_21 = arith.constant 0 : index
    %48 = vector.load %arg7[%c0_20, %c40, %c0_21] : memref<1x48x256xf32, #tpu.memory_space<vmem>>, vector<1x8x256xf32>
    %49 = vector.shape_cast %48 : vector<1x8x256xf32> to vector<8x256xf32>
    %50 = vector.shape_cast %47 : vector<8x256xf32> to vector<1x8x256xf32>
    tpu.vector_store %arg7[%c0_20, %c40, %c0_21], %50 {strides = array<i32>} : memref<1x48x256xf32, #tpu.memory_space<vmem>>, vector<1x8x256xf32>,
    return
  }
  func.func @transform_0(%arg0: i32, %arg1: i32) -> (i32, i32, i32) {
    %c0_i32 = arith.constant 0 : i32
    %c0_i32_0 = arith.constant 0 : i32
    return %arg0, %c0_i32, %arg1 : i32, i32, i32
  }
  func.func @transform_1(%arg0: i32, %arg1: i32) -> (i32, i32) {
    %c0_i32 = arith.constant 0 : i32
    %c0_i32_0 = arith.constant 0 : i32
    %c0_i32_1 = arith.constant 0 : i32
    return %c0_i32, %c0_i32_0 : i32, i32
  }
  func.func @transform_2(%arg0: i32, %arg1: i32) -> (i32, i32) {
    %c0_i32 = arith.constant 0 : i32
    %c0_i32_0 = arith.constant 0 : i32
    %c0_i32_1 = arith.constant 0 : i32
    return %c0_i32, %c0_i32_0 : i32, i32
  }
  func.func @transform_3(%arg0: i32, %arg1: i32) -> (i32, i32) {
    %c0_i32 = arith.constant 0 : i32
    %c0_i32_0 = arith.constant 0 : i32
    %c0_i32_1 = arith.constant 0 : i32
    return %c0_i32, %c0_i32_0 : i32, i32
  }
  func.func @transform_4(%arg0: i32, %arg1: i32) -> (i32, i32) {
    %c0_i32 = arith.constant 0 : i32
    %c0_i32_0 = arith.constant 0 : i32
    %c0_i32_1 = arith.constant 0 : i32
    return %c0_i32, %c0_i32_0 : i32, i32
  }
  func.func @transform_5(%arg0: i32, %arg1: i32) -> (i32, i32, i32) {
    %c0_i32 = arith.constant 0 : i32
    %c0_i32_0 = arith.constant 0 : i32
    return %arg0, %c0_i32, %arg1 : i32, i32, i32
  }
}

</mosaic_0001>

<llo_original>
// kernel: inv_block_affine.1
$region0: #{inv_block_affine.1}
  #allocation0 [shape = 'u32[]', space=smem, size = 0x4, offset = 0x4, fixed_abs, tag = 'smem constant byte address 0x4 - core index']
  #allocation1 [shape = 'u32[144,128]{1,0:T(1,128)}', space=vmem, size = 0x12000, scoped, tag = 'internal scratch']
  %s0 = inlined_call_operand.vmem [shape: f32[2,48,256], index: 0, kind: input, shape index: {}]
  %s1 = inlined_call_operand.vmem [shape: f32[80,48], index: 1, kind: input, shape index: {}]
  %s2 = inlined_call_operand.vmem [shape: f32[80,1], index: 2, kind: input, shape index: {}]
  %s3 = inlined_call_operand.vmem [shape: f32[32,40], index: 3, kind: input, shape index: {}]
  %s4 = inlined_call_operand.vmem [shape: f32[32,1], index: 4, kind: input, shape index: {}]
  %s5 = inlined_call_operand.vmem [shape: f32[2,48,256], index: 5, kind: output, shape index: {}]
  %s6 = sld [smem:[#allocation0]]
  $region53: #{inv_block_affine.1} parent=0
    _
  %s8 = ssub.s32 1, %s6
  %s9 = scalar_select 0, %s8, %s6
  loop: start=0, step=1, limit=4
  $region2: #{inv_block_affine.1} parent=0 // loop_pre_header
    _
  $region3: #{inv_block_affine.1} parent=0 // loop_header
    %s11 = sphi 0, %s15
    %p12 = scmp.ge.s32.totalorder %s11, 4
    %s18 = sphi 0, %s30
    %s19 = sphi 0, %s26
    %s20 = sphi 0, %s18
    %s21 = sphi 0, %s19
    %s22 = sphi 0, %s20
    %s23 = sphi 0, %s21
    %s35 = sphi 0, %s37
    %s38 = sphi 0, %s35
    %s39 = sphi 0, %s38
    %s55 = sphi 0, %s39
    %s59 = sphi 0, %s59
    %s61 = sphi 0, %s59
    %s62 = sphi 0, %s61
    %s76 = sphi 0, %s62
    %s80 = sphi 0, %s80
    %s82 = sphi 0, %s80
    %s83 = sphi 0, %s82
    %s97 = sphi 0, %s83
    %s101 = sphi 0, %s101
    %s103 = sphi 0, %s101
    %s104 = sphi 0, %s103
    %s118 = sphi 0, %s104
    %s122 = sphi 0, %s122
    %s124 = sphi 0, %s122
    %s125 = sphi 0, %s124
    %s139 = sphi 0, %s125
    %s147 = sphi 0, %s149
    %s150 = sphi 0, %s147
    %s151 = sphi 0, %s150
    %s167 = sphi 0, %s151
  $region4: #{inv_block_affine.1} parent=0 // loop_header_branch
    %14 = sbr.rel (%p12) target = $region8
  $region5: #{inv_block_affine.1} parent=0 // loop_body
    %s16 = ssub.s32 %s11, 1
    %s17 = ssub.s32 %s11, 2
    %s24 = sadd.s32 1, %s19
    %p25 = scmp.ge.s32.totalorder %s24, 1
    %s26 = scalar_select %p25, 0, %s24
    %s27 = sadd.s32 1, %s18
    %s28 = scalar_select %p25, %s27, %s18
    %p29 = scmp.ge.s32.totalorder %s28, 2
    %s30 = scalar_select %p29, 0, %s28
    %s31 = ssub.s32 %s18, %s30
    %s32 = ssub.s32 %s19, %s26
    %s33 = sor.u32 %s31, %s32
    %p34 = scmp.eq.s32.totalorder %s33, 0
    %s36 = sadd.s32 %s35, 1
    %s37 = scalar_select %p34, %s35, %s36
    %p40 = pneg %p34
    %p41 = scmp.eq.s32.totalorder %s11, 1
    %p42 = por %p40, %p41
    %p43 = scmp.ne.s32.totalorder %s35, %s38
    %p44 = scmp.eq.s32.totalorder %s11, 0
    %p45 = por %p43, %p44
    %p46 = scmp.ne.s32.totalorder %s35, %s38
    %p47 = scmp.eq.s32.totalorder %s16, 1
    %p48 = por %p46, %p47
    %p49 = scmp.ne.s32.totalorder %s38, %s39
    %p50 = scmp.eq.s32.totalorder %s16, 0
    %p51 = por %p49, %p50
    %p52 = scmp.ne.s32.totalorder %s38, %s39
    %p53 = scmp.eq.s32.totalorder %s17, 1
    %p54 = por %p52, %p53
    %p56 = scmp.ne.s32.totalorder %s39, %s55
    %p57 = scmp.eq.s32.totalorder %s17, 0
    %p58 = por %p56, %p57
    %s60 = sadd.s32 %s59, 1
    %p63 = scmp.eq.s32.totalorder %s11, 1
    %p64 = scmp.ne.s32.totalorder %s59, %s61
    %p65 = scmp.eq.s32.totalorder %s11, 0
    %p66 = por %p64, %p65
    %p67 = scmp.ne.s32.totalorder %s59, %s61
    %p68 = scmp.eq.s32.totalorder %s16, 1
    %p69 = por %p67, %p68
    %p70 = scmp.ne.s32.totalorder %s61, %s62
    %p71 = scmp.eq.s32.totalorder %s16, 0
    %p72 = por %p70, %p71
    %p73 = scmp.ne.s32.totalorder %s61, %s62
    %p74 = scmp.eq.s32.totalorder %s17, 1
    %p75 = por %p73, %p74
    %p77 = scmp.ne.s32.totalorder %s62, %s76
    %p78 = scmp.eq.s32.totalorder %s17, 0
    %p79 = por %p77, %p78
    %s81 = sadd.s32 %s80, 1
    %p84 = scmp.eq.s32.totalorder %s11, 1
    %p85 = scmp.ne.s32.totalorder %s80, %s82
    %p86 = scmp.eq.s32.totalorder %s11, 0
    %p87 = por %p85, %p86
    %p88 = scmp.ne.s32.totalorder %s80, %s82
    %p89 = scmp.eq.s32.totalorder %s16, 1
    %p90 = por %p88, %p89
    %p91 = scmp.ne.s32.totalorder %s82, %s83
    %p92 = scmp.eq.s32.totalorder %s16, 0
    %p93 = por %p91, %p92
    %p94 = scmp.ne.s32.totalorder %s82, %s83
    %p95 = scmp.eq.s32.totalorder %s17, 1
    %p96 = por %p94, %p95
    %p98 = scmp.ne.s32.totalorder %s83, %s97
    %p99 = scmp.eq.s32.totalorder %s17, 0
    %p100 = por %p98, %p99
    %s102 = sadd.s32 %s101, 1
    %p105 = scmp.eq.s32.totalorder %s11, 1
    %p106 = scmp.ne.s32.totalorder %s101, %s103
    %p107 = scmp.eq.s32.totalorder %s11, 0
    %p108 = por %p106, %p107
    %p109 = scmp.ne.s32.totalorder %s101, %s103
    %p110 = scmp.eq.s32.totalorder %s16, 1
    %p111 = por %p109, %p110
    %p112 = scmp.ne.s32.totalorder %s103, %s104
    %p113 = scmp.eq.s32.totalorder %s16, 0
    %p114 = por %p112, %p113
    %p115 = scmp.ne.s32.totalorder %s103, %s104
    %p116 = scmp.eq.s32.totalorder %s17, 1
    %p117 = por %p115, %p116
    %p119 = scmp.ne.s32.totalorder %s104, %s118
    %p120 = scmp.eq.s32.totalorder %s17, 0
    %p121 = por %p119, %p120
    %s123 = sadd.s32 %s122, 1
    %p126 = scmp.eq.s32.totalorder %s11, 1
    %p127 = scmp.ne.s32.totalorder %s122, %s124
    %p128 = scmp.eq.s32.totalorder %s11, 0
    %p129 = por %p127, %p128
    %p130 = scmp.ne.s32.totalorder %s122, %s124
    %p131 = scmp.eq.s32.totalorder %s16, 1
    %p132 = por %p130, %p131
    %p133 = scmp.ne.s32.totalorder %s124, %s125
    %p134 = scmp.eq.s32.totalorder %s16, 0
    %p135 = por %p133, %p134
    %p136 = scmp.ne.s32.totalorder %s124, %s125
    %p137 = scmp.eq.s32.totalorder %s17, 1
    %p138 = por %p136, %p137
    %p140 = scmp.ne.s32.totalorder %s125, %s139
    %p141 = scmp.eq.s32.totalorder %s17, 0
    %p142 = por %p140, %p141
    %s143 = ssub.s32 %s18, %s30
    %s144 = ssub.s32 %s19, %s26
    %s145 = sor.u32 %s143, %s144
    %p146 = scmp.eq.s32.totalorder %s145, 0
    %s148 = sadd.s32 %s147, 1
    %s149 = scalar_select %p146, %s147, %s148
    %p152 = pneg %p146
    %p153 = scmp.eq.s32.totalorder %s11, 1
    %p154 = por %p152, %p153
    %p155 = scmp.ne.s32.totalorder %s147, %s150
    %p156 = scmp.eq.s32.totalorder %s11, 0
    %p157 = por %p155, %p156
    %p158 = scmp.ne.s32.totalorder %s147, %s150
    %p159 = scmp.eq.s32.totalorder %s16, 1
    %p160 = por %p158, %p159
    %p161 = scmp.ne.s32.totalorder %s150, %s151
    %p162 = scmp.eq.s32.totalorder %s16, 0
    %p163 = por %p161, %p162
    %p164 = scmp.ne.s32.totalorder %s150, %s151
    %p165 = scmp.eq.s32.totalorder %s17, 1
    %p166 = por %p164, %p165
    %p168 = scmp.ne.s32.totalorder %s151, %s167
    %p169 = scmp.eq.s32.totalorder %s17, 0
    %p170 = por %p168, %p169
    %p171 = scmp.le.s32.totalorder 1, %s11
    %p172 = scmp.lt.s32.totalorder %s11, 3
    %p173 = pnand %p171, %p172
    %p174 = pneg %p173
    // Predicated region
    $region9: #{inv_block_affine.1} parent=5 // pred_check
      _
    $region10: #{inv_block_affine.1} parent=5 // pred_check_branch
      %176 = sbr.rel (%p173) target = $region12
    $region11: #{inv_block_affine.1} parent=5 // pred_region
      %s177 = ssub.s32 %s11, 1
      // Predicated region
      $region13: #{inv_block_affine.1} parent=11 // pred_check
        %p178 = pneg %p72
      $region14: #{inv_block_affine.1} parent=11 // pred_check_branch
        %180 = sbr.rel (%p178) target = $region16
      $region15: #{inv_block_affine.1} parent=11 // pred_region
        _
      $region16: #{inv_block_affine.1} parent=11 // pred_fallthru
        _
      // Predicated region
      $region17: #{inv_block_affine.1} parent=11 // pred_check
        %p181 = pneg %p93
      $region18: #{inv_block_affine.1} parent=11 // pred_check_branch
        %183 = sbr.rel (%p181) target = $region20
      $region19: #{inv_block_affine.1} parent=11 // pred_region
        _
      $region20: #{inv_block_affine.1} parent=11 // pred_fallthru
        _
      // Predicated region
      $region21: #{inv_block_affine.1} parent=11 // pred_check
        %p184 = pneg %p114
      $region22: #{inv_block_affine.1} parent=11 // pred_check_branch
        %186 = sbr.rel (%p184) target = $region24
      $region23: #{inv_block_affine.1} parent=11 // pred_region
        _
      $region24: #{inv_block_affine.1} parent=11 // pred_fallthru
        _
      // Predicated region
      $region25: #{inv_block_affine.1} parent=11 // pred_check
        %p187 = pneg %p135
      $region26: #{inv_block_affine.1} parent=11 // pred_check_branch
        %189 = sbr.rel (%p187) target = $region28
      $region27: #{inv_block_affine.1} parent=11 // pred_region
        _
      $region28: #{inv_block_affine.1} parent=11 // pred_fallthru
        _
    $region12: #{inv_block_affine.1} parent=5 // pred_fallthru
      _
    %p190 = scmp.lt.s32.totalorder %s11, 2
    // Predicated region
    $region29: #{inv_block_affine.1} parent=5 // pred_check
      %p191 = pneg %p190
    $region30: #{inv_block_affine.1} parent=5 // pred_check_branch
      %193 = sbr.rel (%p191) target = $region32
    $region31: #{inv_block_affine.1} parent=5 // pred_region
      // Predicated region
      $region33: #{inv_block_affine.1} parent=31 // pred_check
        %p194 = pneg %p45
      $region34: #{inv_block_affine.1} parent=31 // pred_check_branch
        %196 = sbr.rel (%p194) target = $region36
      $region35: #{inv_block_affine.1} parent=31 // pred_region
        %s197 = smul.u32 2, %s19
        %p198 = scmp.lt.s32.totalorder %s18, 1
        %s199 = scalar_select %p198, %s18, 1
        %p200 = scmp.lt.s32.totalorder %s197, 1
        %s201 = scalar_select %p200, %s197, 1
        %s202 = smul.addr %s199, 12
        %s203 = sadd.s32 %s201, %s202
        %s204 = smul.addr %s203, 8
        %s205 = scalar_lea.vmem %s0, %s204
        %s206 = smul.u32 2, %s19
      $region36: #{inv_block_affine.1} parent=31 // pred_fallthru
        _
    $region32: #{inv_block_affine.1} parent=5 // pred_fallthru
      _
    %p207 = scmp.le.s32.totalorder 1, %s11
    %p208 = scmp.lt.s32.totalorder %s11, 3
    %p209 = pnand %p207, %p208
    %p210 = pneg %p209
    // Predicated region
    $region37: #{inv_block_affine.1} parent=5 // pred_check
      _
    $region38: #{inv_block_affine.1} parent=5 // pred_check_branch
      %212 = sbr.rel (%p209) target = $region40
    $region39: #{inv_block_affine.1} parent=5 // pred_region
      %s213 = ssub.s32 %s11, 1
      %s214 = smul.u32 2, %s21
      %p215 = scmp.lt.s32.totalorder %s20, 1
      %s216 = scalar_select %p215, %s20, 1
      %p217 = scmp.lt.s32.totalorder %s214, 1
      %s218 = scalar_select %p217, %s214, 1
      %s219 = smul.addr %s216, 12
      %s220 = sadd.s32 %s218, %s219
      %s221 = smul.addr %s220, 8
      %s222 = scalar_lea.vmem %s0, %s221
      %p223 = pneg %p51
      %p224 = pneg %p48
      %p225 = pneg %p72
      %p226 = pneg %p69
      %p227 = pneg %p93
      %p228 = pneg %p90
      %p229 = pneg %p114
      %p230 = pneg %p111
      %p231 = pneg %p135
      %p232 = pneg %p132
      %p233 = pneg %p163
      %p234 = pneg %p160
      %s235 = smul.u32 2, %s21
      %p236 = scmp.lt.s32.totalorder %s20, 1
      %s237 = scalar_select %p236, %s20, 1
      %p238 = scmp.lt.s32.totalorder %s235, 1
      %s239 = scalar_select %p238, %s235, 1
      %s240 = smul.addr %s237, 12
      %s241 = sadd.s32 %s239, %s240
      %s242 = smul.addr %s241, 8
      %s243 = scalar_lea.vmem %s5, %s242
      %s244 = smul.u32 2, %s21
      %p245 = scmp.lt.s32.totalorder %s20, 1
      %s246 = scalar_select %p245, %s20, 1
      %p247 = scmp.lt.s32.totalorder %s244, 1
      %s248 = scalar_select %p247, %s244, 1
      %s249 = smul.addr %s246, 12
      %s250 = sadd.s32 %s248, %s249
      %s251 = smul.addr %s250, 8
      %s252 = scalar_lea.vmem %s0, %s251
      %s253 = smul.u32 2, %s21
      %s254 = smul.u32 2, %s21
      %p255 = scmp.lt.s32.totalorder %s20, 1
      %s256 = scalar_select %p255, %s20, 1
      %p257 = scmp.lt.s32.totalorder %s254, 1
      %s258 = scalar_select %p257, %s254, 1
      %s259 = smul.addr %s256, 12
      %s260 = sadd.s32 %s258, %s259
      %s261 = smul.addr %s260, 8
      %s262 = scalar_lea.vmem %s5, %s261
      %s263 = smul.u32 2, %s21
      %v264 = vld [vmem:[%s252] sm:$0xff]
      %v265 = vld [vmem:[%s252 + $0x8] sm:$0xff]
      %v266 = vld [vmem:[%s252 + $0x10] sm:$0xff]
      %v267 = vld [vmem:[%s252 + $0x18] sm:$0xff]
      %v268 = vld [vmem:[%s252 + $0x20] sm:$0xff]
      %v269 = vld [vmem:[%s252 + $0x28] sm:$0xff]
      %v270 = vld [vmem:[%s252 + $0x30] sm:$0xff]
      %v271 = vld [vmem:[%s252 + $0x38] sm:$0xff]
      %v272 = vld [vmem:[%s252 + $0x40] sm:$0xff]
      %v273 = vld [vmem:[%s252 + $0x48] sm:$0xff]
      %v274 = vld [vmem:[%s252 + $0x50] sm:$0xff]
      %v275 = vld [vmem:[%s252 + $0x58] sm:$0xff]
      %v276 = vld [vmem:[%s1] sm:$0xff]
      %v277 = vld [vmem:[%s1 + $0x8] sm:$0xff]
      %v278 = vld [vmem:[%s1 + $0x10] sm:$0xff]
      %v279 = vld [vmem:[%s1 + $0x18] sm:$0xff]
      %v280 = vld [vmem:[%s1 + $0x20] sm:$0xff]
      %v281 = vld [vmem:[%s1 + $0x28] sm:$0xff]
      %v282 = vld [vmem:[%s1 + $0x30] sm:$0xff]
      %v283 = vld [vmem:[%s1 + $0x38] sm:$0xff]
      %v284 = vld [vmem:[%s1 + $0x40] sm:$0xff]
      %v285 = vld [vmem:[%s1 + $0x48] sm:$0xff]
      %v286 = vld [vmem:[%s2] sm:$0xff]
      %v287 = vld [vmem:[%s2 + $0x8] sm:$0xff]
      %v288 = vld [vmem:[%s2 + $0x10] sm:$0xff]
      %v289 = vld [vmem:[%s2 + $0x18] sm:$0xff]
      %v290 = vld [vmem:[%s2 + $0x20] sm:$0xff]
      %v291 = vld [vmem:[%s2 + $0x28] sm:$0xff]
      %v292 = vld [vmem:[%s2 + $0x30] sm:$0xff]
      %v293 = vld [vmem:[%s2 + $0x38] sm:$0xff]
      %v294 = vld [vmem:[%s2 + $0x40] sm:$0xff]
      %v295 = vld [vmem:[%s2 + $0x48] sm:$0xff]
      %297 = vset.pattern.permute.xlu0 0
      %298 = vperm.xlu0 %297, %v286
      %v299 = vpop.permute.xlu0 %298
      %302 = vset.pattern.permute.xlu0 0
      %303 = vperm.xlu0 %302, %v287
      %v304 = vpop.permute.xlu0 %303
      %307 = vset.pattern.permute.xlu0 0
      %308 = vperm.xlu0 %307, %v288
      %v309 = vpop.permute.xlu0 %308
      %312 = vset.pattern.permute.xlu0 0
      %313 = vperm.xlu0 %312, %v289
      %v314 = vpop.permute.xlu0 %313
      %317 = vset.pattern.permute.xlu0 0
      %318 = vperm.xlu0 %317, %v290
      %v319 = vpop.permute.xlu0 %318
      %322 = vset.pattern.permute.xlu0 0
      %323 = vperm.xlu0 %322, %v291
      %v324 = vpop.permute.xlu0 %323
      %327 = vset.pattern.permute.xlu0 0
      %328 = vperm.xlu0 %327, %v292
      %v329 = vpop.permute.xlu0 %328
      %332 = vset.pattern.permute.xlu0 0
      %333 = vperm.xlu0 %332, %v293
      %v334 = vpop.permute.xlu0 %333
      %337 = vset.pattern.permute.xlu0 0
      %338 = vperm.xlu0 %337, %v294
      %v339 = vpop.permute.xlu0 %338
      %342 = vset.pattern.permute.xlu0 0
      %343 = vperm.xlu0 %342, %v295
      %v344 = vpop.permute.xlu0 %343
      %vm346 = vcmask 392192
      %v348 = vsel %vm346, %v276, 0
      %v351 = vsel %vm346, %v277, 0
      %v354 = vsel %vm346, %v278, 0
      %v357 = vsel %vm346, %v279, 0
      %v360 = vsel %vm346, %v280, 0
      %v363 = vsel %vm346, %v281, 0
      %v366 = vsel %vm346, %v282, 0
      %v369 = vsel %vm346, %v283, 0
      %v372 = vsel %vm346, %v284, 0
      %v375 = vsel %vm346, %v285, 0
      %377 = vmatprep.subr.mxu0 %v265
      %378 = vmatpush1.msra.mxu0 %v264
      %379 = vmatprep.subr.mxu0 %v267
      %380 = vmatpush1.msra.mxu0 %v266
      %381 = vmatprep.subr.mxu0 %v269
      %382 = vmatpush1.msra.mxu0 %v268
      %383 = vmatprep.subr.mxu0 %v271
      %384 = vmatpush1.msra.mxu0 %v270
      %385 = vmatprep.subr.mxu0 %v273
      %386 = vmatpush1.msra.mxu0 %v272
      %387 = vmatprep.subr.mxu0 %v275
      %388 = vmatpush1.msra.mxu0 %v274
      %389 = vmatprep.subr.mxu0 0.0
      %390 = vmatpush1.msra.mxu0 0.0
      %391 = vmatprep.subr.mxu0 0.0
      %392 = vmatpush1.msra.mxu0 0.0
      %393 = vmatprep.subr.mxu0 0.0
      %394 = vmatpush1.msra.mxu0 0.0
      %395 = vmatprep.subr.mxu0 0.0
      %396 = vmatpush1.msra.mxu0 0.0
      %397 = vmatprep.subr.mxu0 0.0
      %398 = vmatpush1.msra.mxu0 0.0
      %399 = vmatprep.subr.mxu0 0.0
      %400 = vmatpush1.msra.mxu0 0.0
      %401 = vmatprep.subr.mxu0 0.0
      %402 = vmatpush1.msra.mxu0 0.0
      %403 = vmatprep.subr.mxu0 0.0
      %404 = vmatpush1.msra.mxu0 0.0
      %405 = vmatprep.subr.mxu0 0.0
      %406 = vmatpush1.msra.mxu0 0.0
      %407 = vmatprep.subr.mxu0 0.0
      %408 = vmatpush1.msra.mxu0 0.0
      %409 = vmatprep.subr.mxu0 0.0
      %410 = vmatpush1.msra.mxu0 0.0
      %411 = vmatprep.subr.mxu0 0.0
      %412 = vmatpush1.msra.mxu0 0.0
      %413 = vmatprep.subr.mxu0 0.0
      %414 = vmatpush1.msra.mxu0 0.0
      %415 = vmatprep.subr.mxu0 0.0
      %416 = vmatpush1.msra.mxu0 0.0
      %417 = vmatprep.subr.mxu0 0.0
      %418 = vmatpush1.msra.mxu0 0.0
      %419 = vmatprep.subr.mxu0 0.0
      %420 = vmatpush1.msra.mxu0 0.0
      %421 = vmatprep.subr.mxu0 0.0
      %422 = vmatpush1.msra.mxu0 0.0
      %423 = vmatprep.subr.mxu0 0.0
      %424 = vmatpush1.msra.mxu0 0.0
      %425 = vmatprep.subr.mxu0 0.0
      %426 = vmatpush1.msra.mxu0 0.0
      %427 = vmatprep.subr.mxu0 0.0
      %428 = vmatpush1.msra.mxu0 0.0
      %429 = vmatprep.subr.mxu0 0.0
      %430 = vmatpush1.msra.mxu0 0.0
      %431 = vmatprep.subr.mxu0 0.0
      %432 = vmatpush1.msra.mxu0 0.0
      %433 = vmatprep.subr.mxu0 0.0
      %434 = vmatpush1.msra.mxu0 0.0
      %435 = vmatprep.subr.mxu0 0.0
      %436 = vmatpush1.msra.mxu0 0.0
      %437 = vmatprep.subr.mxu0 0.0
      %438 = vmatpush1.msra.mxu0 0.0
      %439 = vmatprep.subr.mxu0 0.0
      %440 = vmatpush1.msra.mxu0 0.0
      %441 = vmatprep.mubr.f32.mxu0 0.0
      %442 = vmatmul.mubr.f32.gmra.mrb[0].mxu0 %v348
      %v443 = vpop.f32.mrb[0].mxu0
      %v444 = vadd.f32 %v299, %v443
      %v445 = vpop.f32.mrb[0].mxu0
      %v446 = vadd.f32 %v299, %v445
      %447 = vmatprep.mubr.f32.mxu0 0.0
      %448 = vmatmul.mubr.f32.gmra.mrb[0].mxu0 %v351
      %v449 = vpop.f32.mrb[0].mxu0
      %v450 = vadd.f32 %v304, %v449
      %v451 = vpop.f32.mrb[0].mxu0
      %v452 = vadd.f32 %v304, %v451
      %453 = vmatprep.mubr.f32.mxu0 0.0
      %454 = vmatmul.mubr.f32.gmra.mrb[0].mxu0 %v354
      %v455 = vpop.f32.mrb[0].mxu0
      %v456 = vadd.f32 %v309, %v455
      %v457 = vpop.f32.mrb[0].mxu0
      %v458 = vadd.f32 %v309, %v457
      %459 = vmatprep.mubr.f32.mxu0 0.0
      %460 = vmatmul.mubr.f32.gmra.mrb[0].mxu0 %v357
      %v461 = vpop.f32.mrb[0].mxu0
      %v462 = vadd.f32 %v314, %v461
      %v463 = vpop.f32.mrb[0].mxu0
      %v464 = vadd.f32 %v314, %v463
      %465 = vmatprep.mubr.f32.mxu0 0.0
      %466 = vmatmul.mubr.f32.gmra.mrb[0].mxu0 %v360
      %v467 = vpop.f32.mrb[0].mxu0
      %v468 = vadd.f32 %v319, %v467
      %v469 = vpop.f32.mrb[0].mxu0
      %v470 = vadd.f32 %v319, %v469
      %471 = vmatprep.mubr.f32.mxu0 0.0
      %472 = vmatmul.mubr.f32.gmra.mrb[0].mxu0 %v363
      %v473 = vpop.f32.mrb[0].mxu0
      %v474 = vadd.f32 %v324, %v473
      %v475 = vpop.f32.mrb[0].mxu0
      %v476 = vadd.f32 %v324, %v475
      %477 = vmatprep.mubr.f32.mxu0 0.0
      %478 = vmatmul.mubr.f32.gmra.mrb[0].mxu0 %v366
      %v479 = vpop.f32.mrb[0].mxu0
      %v480 = vadd.f32 %v329, %v479
      %v481 = vpop.f32.mrb[0].mxu0
      %v482 = vadd.f32 %v329, %v481
      %483 = vmatprep.mubr.f32.mxu0 0.0
      %484 = vmatmul.mubr.f32.gmra.mrb[0].mxu0 %v369
      %v485 = vpop.f32.mrb[0].mxu0
      %v486 = vadd.f32 %v334, %v485
      %v487 = vpop.f32.mrb[0].mxu0
      %v488 = vadd.f32 %v334, %v487
      %489 = vmatprep.mubr.f32.mxu0 0.0
      %490 = vmatmul.mubr.f32.gmra.mrb[0].mxu0 %v372
      %v491 = vpop.f32.mrb[0].mxu0
      %v492 = vadd.f32 %v339, %v491
      %v493 = vpop.f32.mrb[0].mxu0
      %v494 = vadd.f32 %v339, %v493
      %495 = vmatprep.mubr.f32.mxu0 0.0
      %496 = vmatmul.mubr.f32.gmra.mrb[0].mxu0 %v375
      %v497 = vpop.f32.mrb[0].mxu0
      %v498 = vadd.f32 %v344, %v497
      %v499 = vpop.f32.mrb[0].mxu0
      %v500 = vadd.f32 %v344, %v499
      %501 = vdwg.mxu0
      %v502 = vmul.f32 %v474, 0.5
      %v503 = vmul.f32 %v476, 0.5
      %v504 = vmul.f32 %v480, 0.5
      %v505 = vmul.f32 %v482, 0.5
      %v506 = vmul.f32 %v486, 0.5
      %v507 = vmul.f32 %v488, 0.5
      %v508 = vmul.f32 %v492, 0.5
      %v509 = vmul.f32 %v494, 0.5
      %v510 = vmul.f32 %v498, 0.5
      %v511 = vmul.f32 %v500, 0.5
      %v512 = vtanh.pop %v502
      %v513 = vtanh.pop %v503
      %v514 = vtanh.pop %v504
      %v515 = vtanh.pop %v505
      %v516 = vtanh.pop %v506
      %v517 = vtanh.pop %v507
      %v518 = vtanh.pop %v508
      %v519 = vtanh.pop %v509
      %v520 = vtanh.pop %v510
      %v521 = vtanh.pop %v511
      %v522 = vmul.f32 %v512, 2.0
      %v523 = vmul.f32 %v513, 2.0
      %v524 = vmul.f32 %v514, 2.0
      %v525 = vmul.f32 %v515, 2.0
      %v526 = vmul.f32 %v516, 2.0
      %v527 = vmul.f32 %v517, 2.0
      %v528 = vmul.f32 %v518, 2.0
      %v529 = vmul.f32 %v519, 2.0
      %v530 = vmul.f32 %v520, 2.0
      %v531 = vmul.f32 %v521, 2.0
      %v532 = vmul.f32 %v522, 1.442695
      %v533 = vpow.pop %v532
      %v534 = vmul.f32 %v523, 1.442695
      %v535 = vpow.pop %v534
      %v536 = vmul.f32 %v524, 1.442695
      %v537 = vpow.pop %v536
      %v538 = vmul.f32 %v525, 1.442695
      %v539 = vpow.pop %v538
      %v540 = vmul.f32 %v526, 1.442695
      %v541 = vpow.pop %v540
      %v542 = vmul.f32 %v527, 1.442695
      %v543 = vpow.pop %v542
      %v544 = vmul.f32 %v528, 1.442695
      %v545 = vpow.pop %v544
      %v546 = vmul.f32 %v529, 1.442695
      %v547 = vpow.pop %v546
      %v548 = vmul.f32 %v530, 1.442695
      %v549 = vpow.pop %v548
      %v550 = vmul.f32 %v531, 1.442695
      %v551 = vpow.pop %v550
      %v552 = vmul.f32 %v533, %v264
      %v553 = vmul.f32 %v535, %v265
      %v554 = vmul.f32 %v537, %v266
      %v555 = vmul.f32 %v539, %v267
      %v556 = vmul.f32 %v541, %v268
      %v557 = vmul.f32 %v543, %v269
      %v558 = vmul.f32 %v545, %v270
      %v559 = vmul.f32 %v547, %v271
      %v560 = vmul.f32 %v549, %v272
      %v561 = vmul.f32 %v551, %v273
      %v562 = vadd.f32 %v552, %v444
      %v563 = vadd.f32 %v553, %v446
      %v564 = vadd.f32 %v554, %v450
      %v565 = vadd.f32 %v555, %v452
      %v566 = vadd.f32 %v556, %v456
      %v567 = vadd.f32 %v557, %v458
      %v568 = vadd.f32 %v558, %v462
      %v569 = vadd.f32 %v559, %v464
      %v570 = vadd.f32 %v560, %v468
      %v571 = vadd.f32 %v561, %v470
      %v572 = vld [vmem:[%s3] sm:$0xff]
      %v573 = vld [vmem:[%s3 + $0x8] sm:$0xff]
      %v574 = vld [vmem:[%s3 + $0x10] sm:$0xff]
      %v575 = vld [vmem:[%s3 + $0x18] sm:$0xff]
      %v576 = vld [vmem:[%s4] sm:$0xff]
      %v577 = vld [vmem:[%s4 + $0x8] sm:$0xff]
      %v578 = vld [vmem:[%s4 + $0x10] sm:$0xff]
      %v579 = vld [vmem:[%s4 + $0x18] sm:$0xff]
      %581 = vset.pattern.permute.xlu0 0
      %582 = vperm.xlu0 %581, %v576
      %v583 = vpop.permute.xlu0 %582
      %586 = vset.pattern.permute.xlu0 0
      %587 = vperm.xlu0 %586, %v577
      %v588 = vpop.permute.xlu0 %587
      %591 = vset.pattern.permute.xlu0 0
      %592 = vperm.xlu0 %591, %v578
      %v593 = vpop.permute.xlu0 %592
      %596 = vset.pattern.permute.xlu0 0
      %597 = vperm.xlu0 %596, %v579
      %v598 = vpop.permute.xlu0 %597
      %vm600 = vcmask 326656
      %v602 = vsel %vm600, %v572, 0
      %v605 = vsel %vm600, %v573, 0
      %v608 = vsel %vm600, %v574, 0
      %v611 = vsel %vm600, %v575, 0
      %613 = vmatprep.subr.mxu0 %v563
      %614 = vmatpush1.msra.mxu0 %v562
      %615 = vmatprep.subr.mxu0 %v565
      %616 = vmatpush1.msra.mxu0 %v564
      %617 = vmatprep.subr.mxu0 %v567
      %618 = vmatpush1.msra.mxu0 %v566
      %619 = vmatprep.subr.mxu0 %v569
      %620 = vmatpush1.msra.mxu0 %v568
      %621 = vmatprep.subr.mxu0 %v571
      %622 = vmatpush1.msra.mxu0 %v570
      %623 = vmatprep.subr.mxu0 0.0
      %624 = vmatpush1.msra.mxu0 0.0
      %625 = vmatprep.subr.mxu0 0.0
      %626 = vmatpush1.msra.mxu0 0.0
      %627 = vmatprep.subr.mxu0 0.0
      %628 = vmatpush1.msra.mxu0 0.0
      %629 = vmatprep.subr.mxu0 0.0
      %630 = vmatpush1.msra.mxu0 0.0
      %631 = vmatprep.subr.mxu0 0.0
      %632 = vmatpush1.msra.mxu0 0.0
      %633 = vmatprep.subr.mxu0 0.0
      %634 = vmatpush1.msra.mxu0 0.0
      %635 = vmatprep.subr.mxu0 0.0
      %636 = vmatpush1.msra.mxu0 0.0
      %637 = vmatprep.subr.mxu0 0.0
      %638 = vmatpush1.msra.mxu0 0.0
      %639 = vmatprep.subr.mxu0 0.0
      %640 = vmatpush1.msra.mxu0 0.0
      %641 = vmatprep.subr.mxu0 0.0
      %642 = vmatpush1.msra.mxu0 0.0
      %643 = vmatprep.subr.mxu0 0.0
      %644 = vmatpush1.msra.mxu0 0.0
      %645 = vmatprep.subr.mxu0 0.0
      %646 = vmatpush1.msra.mxu0 0.0
      %647 = vmatprep.subr.mxu0 0.0
      %648 = vmatpush1.msra.mxu0 0.0
      %649 = vmatprep.subr.mxu0 0.0
      %650 = vmatpush1.msra.mxu0 0.0
      %651 = vmatprep.subr.mxu0 0.0
      %652 = vmatpush1.msra.mxu0 0.0
      %653 = vmatprep.subr.mxu0 0.0
      %654 = vmatpush1.msra.mxu0 0.0
      %655 = vmatprep.subr.mxu0 0.0
      %656 = vmatpush1.msra.mxu0 0.0
      %657 = vmatprep.subr.mxu0 0.0
      %658 = vmatpush1.msra.mxu0 0.0
      %659 = vmatprep.subr.mxu0 0.0
      %660 = vmatpush1.msra.mxu0 0.0
      %661 = vmatprep.subr.mxu0 0.0
      %662 = vmatpush1.msra.mxu0 0.0
      %663 = vmatprep.subr.mxu0 0.0
      %664 = vmatpush1.msra.mxu0 0.0
      %665 = vmatprep.subr.mxu0 0.0
      %666 = vmatpush1.msra.mxu0 0.0
      %667 = vmatprep.subr.mxu0 0.0
      %668 = vmatpush1.msra.mxu0 0.0
      %669 = vmatprep.subr.mxu0 0.0
      %670 = vmatpush1.msra.mxu0 0.0
      %671 = vmatprep.subr.mxu0 0.0
      %672 = vmatpush1.msra.mxu0 0.0
      %673 = vmatprep.subr.mxu0 0.0
      %674 = vmatpush1.msra.mxu0 0.0
      %675 = vmatprep.subr.mxu0 0.0
      %676 = vmatpush1.msra.mxu0 0.0
      %677 = vmatprep.mubr.f32.mxu0 0.0
      %678 = vmatmul.mubr.f32.gmra.mrb[0].mxu0 %v602
      %v679 = vpop.f32.mrb[0].mxu0
      %v680 = vadd.f32 %v583, %v679
      %v681 = vpop.f32.mrb[0].mxu0
      %v682 = vadd.f32 %v583, %v681
      %683 = vmatprep.mubr.f32.mxu0 0.0
      %684 = vmatmul.mubr.f32.gmra.mrb[0].mxu0 %v605
      %v685 = vpop.f32.mrb[0].mxu0
      %v686 = vadd.f32 %v588, %v685
      %v687 = vpop.f32.mrb[0].mxu0
      %v688 = vadd.f32 %v588, %v687
      %689 = vmatprep.mubr.f32.mxu0 0.0
      %690 = vmatmul.mubr.f32.gmra.mrb[0].mxu0 %v608
      %v691 = vpop.f32.mrb[0].mxu0
      %v692 = vadd.f32 %v593, %v691
      %v693 = vpop.f32.mrb[0].mxu0
      %v694 = vadd.f32 %v593, %v693
      %695 = vmatprep.mubr.f32.mxu0 0.0
      %696 = vmatmul.mubr.f32.gmra.mrb[0].mxu0 %v611
      %v697 = vpop.f32.mrb[0].mxu0
      %v698 = vadd.f32 %v598, %v697
      %v699 = vpop.f32.mrb[0].mxu0
      %v700 = vadd.f32 %v598, %v699
      %701 = vdwg.mxu0
      %v702 = vmul.f32 %v680, 0.5
      %v703 = vmul.f32 %v682, 0.5
      %v704 = vmul.f32 %v686, 0.5
      %v705 = vmul.f32 %v688, 0.5
      %v706 = vtanh.pop %v702
      %v707 = vtanh.pop %v703
      %v708 = vtanh.pop %v704
      %v709 = vtanh.pop %v705
      %v710 = vmul.f32 %v706, 2.0
      %v711 = vmul.f32 %v707, 2.0
      %v712 = vmul.f32 %v708, 2.0
      %v713 = vmul.f32 %v709, 2.0
      %v714 = vmul.f32 %v710, 1.442695
      %v715 = vpow.pop %v714
      %v716 = vmul.f32 %v711, 1.442695
      %v717 = vpow.pop %v716
      %v718 = vmul.f32 %v712, 1.442695
      %v719 = vpow.pop %v718
      %v720 = vmul.f32 %v713, 1.442695
      %v721 = vpow.pop %v720
      %v722 = vmul.f32 %v715, %v272
      %v723 = vmul.f32 %v717, %v273
      %v724 = vmul.f32 %v719, %v274
      %v725 = vmul.f32 %v721, %v275
      %v726 = vadd.f32 %v722, %v692
      %v727 = vadd.f32 %v723, %v694
      %v728 = vadd.f32 %v724, %v698
      %v729 = vadd.f32 %v725, %v700
      %730 = vst [vmem:[%s262] sm:$0xff] %v562
      %731 = vst [vmem:[%s262 + $0x8] sm:$0xff] %v563
      %732 = vst [vmem:[%s262 + $0x10] sm:$0xff] %v564
      %733 = vst [vmem:[%s262 + $0x18] sm:$0xff] %v565
      %734 = vst [vmem:[%s262 + $0x20] sm:$0xff] %v566
      %735 = vst [vmem:[%s262 + $0x28] sm:$0xff] %v567
      %736 = vst [vmem:[%s262 + $0x30] sm:$0xff] %v568
      %737 = vst [vmem:[%s262 + $0x38] sm:$0xff] %v569
      %v738 = vlaneseq
      %v739 = vshrl.u32 %v738, 7
      %vm740 = vcmp.lt.s32.totalorder %v739, 4
      %v741 = vsel %vm740, %v570, %v726
      %v742 = vsel %vm740, %v571, %v727
      %743 = vst [vmem:[%s262 + $0x40] sm:$0xff] %v741
      %744 = vst [vmem:[%s262 + $0x48] sm:$0xff] %v742
      %745 = vst [vmem:[%s262 + $0x50] sm:$0xff] %v728
      %746 = vst [vmem:[%s262 + $0x58] sm:$0xff] %v729
      %s747 = smul.u32 2, %s21
      %p748 = scmp.lt.s32.totalorder %s20, 1
      %s749 = scalar_select %p748, %s20, 1
      %p750 = scmp.lt.s32.totalorder %s747, 1
      %s751 = scalar_select %p750, %s747, 1
      %s752 = smul.addr %s749, 12
      %s753 = sadd.s32 %s751, %s752
      %s754 = smul.addr %s753, 8
      %s755 = scalar_lea.vmem %s5, %s754
      // Predicated region
      $region41: #{inv_block_affine.1} parent=39 // pred_check
        %p756 = pneg %p160
      $region42: #{inv_block_affine.1} parent=39 // pred_check_branch
        %758 = sbr.rel (%p756) target = $region44
      $region43: #{inv_block_affine.1} parent=39 // pred_region
        %s759 = smul.u32 2, %s21
      $region44: #{inv_block_affine.1} parent=39 // pred_fallthru
        _
    $region40: #{inv_block_affine.1} parent=5 // pred_fallthru
      _
    %p760 = scmp.le.s32.totalorder 2, %s11
    // Predicated region
    $region45: #{inv_block_affine.1} parent=5 // pred_check
      %p761 = pneg %p760
    $region46: #{inv_block_affine.1} parent=5 // pred_check_branch
      %763 = sbr.rel (%p761) target = $region48
    $region47: #{inv_block_affine.1} parent=5 // pred_region
      %s764 = ssub.s32 %s11, 2
      // Predicated region
      $region49: #{inv_block_affine.1} parent=47 // pred_check
        %p765 = pneg %p166
      $region50: #{inv_block_affine.1} parent=47 // pred_check_branch
        %767 = sbr.rel (%p765) target = $region52
      $region51: #{inv_block_affine.1} parent=47 // pred_region
        %s768 = smul.u32 2, %s23
        %p769 = scmp.lt.s32.totalorder %s22, 1
        %s770 = scalar_select %p769, %s22, 1
        %p771 = scmp.lt.s32.totalorder %s768, 1
        %s772 = scalar_select %p771, %s768, 1
        %s773 = smul.addr %s770, 12
        %s774 = sadd.s32 %s772, %s773
        %s775 = smul.addr %s774, 8
        %s776 = scalar_lea.vmem %s5, %s775
      $region52: #{inv_block_affine.1} parent=47 // pred_fallthru
        _
    $region48: #{inv_block_affine.1} parent=5 // pred_fallthru
      _
  $region6: #{inv_block_affine.1} parent=0 // loop_footer
    %s15 = sadd.s32 1, %s11
  $region7: #{inv_block_affine.1} parent=0 // loop_footer_branch
    %10 = sbr.rel target = $region3
  $region8: #{inv_block_affine.1} parent=0 // loop_exit
    _

</llo_original>
